<compile_context>
chip_gen: v5e
topology: v5e:2x2
jax: 0.10.0
libtpu: 0.0.40
codegen_flags: <defaults>
</compile_context>

<pallas_src>
import functools

import jax
import jax.numpy as jnp
from jax.experimental import pallas as pl
from jax.experimental.pallas import tpu as pltpu


def _embed_kernel(x_ref, w_ref, b_ref, pos_ref, o_ref):
    # x_ref:   (1, tn, K)  im2col patch tile for one image
    # w_ref:   (K, D)      full patch-embedding weight (in, out)
    # b_ref:   (1, D)      conv bias
    # pos_ref: (tn, D)     positional-embedding rows for this patch tile
    # o_ref:   (1, tn, D)  output tile
    x = x_ref[0]                                        # (tn, K), native dtype
    y = jnp.dot(x, w_ref[...], preferred_element_type=jnp.float32)
    y = y + b_ref[...].astype(jnp.float32) + pos_ref[...].astype(jnp.float32)
    o_ref[0] = y.astype(o_ref.dtype)


@functools.partial(jax.jit, static_argnames=("patch_size", "tn"))
def siglip_vision_embeddings(pixel_values, conv_weight, conv_bias, pos_embed,
                             *, patch_size, tn=256):
    """pixel_values: (B, C, H, W); conv_weight: (D, C, P, P);
    conv_bias: (D,); pos_embed: (num_patches, D). Returns (B, num_patches, D)."""
    B, C, H, W = pixel_values.shape
    P = patch_size
    Hp, Wp = H // P, W // P
    N = Hp * Wp                       # num_patches
    D = conv_weight.shape[0]          # embed_dim
    K = C * P * P

    # im2col: non-overlapping PxP patches -> (B, N, K), (c, ph, pw) minor order
    x = pixel_values.reshape(B, C, Hp, P, Wp, P)
    x = x.transpose(0, 2, 4, 1, 3, 5).reshape(B, N, K)

    # conv weight (D, C, P, P) -> (K, D), same (c, ph, pw) flatten order
    w = conv_weight.reshape(D, K).T
    b2 = conv_bias.reshape(1, D)

    # Row tile along the patch axis; pad rather than assert divisibility.
    tn_eff = min(tn, N)
    if tn_eff < N:
        tn_eff = max(8, (tn_eff // 8) * 8)
    n_tiles = (N + tn_eff - 1) // tn_eff
    N_pad = n_tiles * tn_eff
    if N_pad != N:
        x = jnp.pad(x, ((0, 0), (0, N_pad - N), (0, 0)))
        pos = jnp.pad(pos_embed, ((0, N_pad - N), (0, 0)))
    else:
        pos = pos_embed

    flops = 2 * B * N_pad * K * D
    bytes_accessed = (x.size * x.dtype.itemsize
                      + w.size * w.dtype.itemsize
                      + b2.size * b2.dtype.itemsize
                      + pos.size * pos.dtype.itemsize
                      + B * N_pad * D * x.dtype.itemsize)

    out = pl.pallas_call(
        _embed_kernel,
        out_shape=jax.ShapeDtypeStruct((B, N_pad, D), pixel_values.dtype),
        grid_spec=pl.GridSpec(
            grid=(B, n_tiles),
            in_specs=[
                pl.BlockSpec((1, tn_eff, K), lambda b, j: (b, j, 0)),  # patches
                pl.BlockSpec((K, D), lambda b, j: (0, 0)),             # weight (resident)
                pl.BlockSpec((1, D), lambda b, j: (0, 0)),             # conv bias
                pl.BlockSpec((tn_eff, D), lambda b, j: (j, 0)),        # pos-embed rows
            ],
            out_specs=pl.BlockSpec((1, tn_eff, D), lambda b, j: (b, j, 0)),
        ),
        compiler_params=pltpu.CompilerParams(
            dimension_semantics=("parallel", "parallel"),
            vmem_limit_bytes=64 * 1024 * 1024),
        cost_estimate=pl.CostEstimate(
            flops=flops, transcendentals=0, bytes_accessed=bytes_accessed),
    )(x, w, b2, pos)

    return out[:, :N, :]


def _reference(pixel_values, conv_weight, conv_bias, pos_embed, patch_size):
    P = patch_size
    out = jax.lax.conv_general_dilated(
        pixel_values, conv_weight, window_strides=(P, P), padding="VALID",
        dimension_numbers=("NCHW", "OIHW", "NCHW"))
    out = out + conv_bias[None, :, None, None]
    B, D, Hp, Wp = out.shape
    emb = out.reshape(B, D, Hp * Wp).transpose(0, 2, 1)   # flatten(2).transpose(1,2)
    return emb + pos_embed[None]


if __name__ == "__main__":
    # Small synthetic config: channels=3, image=16, patch=4 -> 16 patches, hidden=32
    B, C, IMG, P, D = 2, 3, 16, 4, 32
    N = (IMG // P) ** 2

    key = jax.random.PRNGKey(0)
    kx, kw, kb, kp = jax.random.split(key, 4)

    pixel_values = jax.random.normal(kx, (B, C, IMG, IMG), dtype=jnp.float32)
    conv_weight = jax.random.normal(kw, (D, C, P, P), dtype=jnp.float32) * 0.02
    conv_bias = jax.random.normal(kb, (D,), dtype=jnp.float32) * 0.01
    pos_embed = jax.random.normal(kp, (N, D), dtype=jnp.float32) * 0.02

    out = siglip_vision_embeddings(pixel_values, conv_weight, conv_bias,
                                   pos_embed, patch_size=P)
    out = jax.block_until_ready(out)

    ref = _reference(pixel_values, conv_weight, conv_bias, pos_embed, P)
    assert out.shape == (B, N, D)
    assert jnp.allclose(out, ref, atol=1e-4, rtol=1e-4), "mismatch vs reference"

    print("KERNEL_OK")
</pallas_src>

<mosaic_0001>
module attributes {stable_mosaic.version = 11 : i64} {
  func.func @_embed_kernel(%arg0: i32, %arg1: i32, %arg2: memref<1x16x48xf32, #tpu.memory_space<vmem>>, %arg3: memref<48x32xf32, #tpu.memory_space<vmem>>, %arg4: memref<1x32xf32, #tpu.memory_space<vmem>>, %arg5: memref<16x32xf32, #tpu.memory_space<vmem>>, %arg6: memref<1x16x32xf32, #tpu.memory_space<vmem>>) attributes {dimension_semantics = [#tpu.dimension_semantics<parallel>, #tpu.dimension_semantics<parallel>], iteration_bounds = array<i64: 2, 1>, scalar_prefetch = 0 : i64, scratch_operands = 0 : i64, tpu.core_type = #tpu.core_type<tc>, window_params = [{transform_indices = @transform_0, window_bounds = array<i64: 1, 16, 48>}, {pipeline_mode = #tpu.pipeline_mode<synchronous>, transform_indices = @transform_1, window_bounds = array<i64: 48, 32>}, {pipeline_mode = #tpu.pipeline_mode<synchronous>, transform_indices = @transform_2, window_bounds = array<i64: 1, 32>}, {transform_indices = @transform_3, window_bounds = array<i64: 16, 32>}, {transform_indices = @transform_4, window_bounds = array<i64: 1, 16, 32>}]} {
    %c0 = arith.constant 0 : index
    %c0_0 = arith.constant 0 : index
    %c0_1 = arith.constant 0 : index
    %0 = vector.load %arg2[%c0, %c0_0, %c0_1] : memref<1x16x48xf32, #tpu.memory_space<vmem>>, vector<1x16x48xf32>
    %1 = vector.shape_cast %0 : vector<1x16x48xf32> to vector<16x48xf32>
    %c0_2 = arith.constant 0 : index
    %c0_3 = arith.constant 0 : index
    %2 = vector.load %arg3[%c0_2, %c0_3] : memref<48x32xf32, #tpu.memory_space<vmem>>, vector<48x32xf32>
    %cst = arith.constant dense<0.000000e+00> : vector<16x32xf32>
    %3 = tpu.matmul %1, %2, %cst {dimension_numbers = #tpu.dot_dimension_numbers<[1], [0], [0], [1], [0, 0, 1, 1], [], []>} : vector<16x48xf32>, vector<48x32xf32>, vector<16x32xf32> -> vector<16x32xf32>
    %c0_4 = arith.constant 0 : index
    %c0_5 = arith.constant 0 : index
    %4 = vector.load %arg4[%c0_4, %c0_5] : memref<1x32xf32, #tpu.memory_space<vmem>>, vector<1x32xf32>
    %5 = vector.broadcast %4 : vector<1x32xf32> to vector<16x32xf32>
    %6 = arith.addf %3, %5 : vector<16x32xf32>
    %c0_6 = arith.constant 0 : index
    %c0_7 = arith.constant 0 : index
    %7 = vector.load %arg5[%c0_6, %c0_7] : memref<16x32xf32, #tpu.memory_space<vmem>>, vector<16x32xf32>
    %8 = arith.addf %6, %7 : vector<16x32xf32>
    %c0_8 = arith.constant 0 : index
    %c0_9 = arith.constant 0 : index
    %c0_10 = arith.constant 0 : index
    %9 = vector.load %arg6[%c0_8, %c0_9, %c0_10] : memref<1x16x32xf32, #tpu.memory_space<vmem>>, vector<1x16x32xf32>
    %10 = vector.shape_cast %9 : vector<1x16x32xf32> to vector<16x32xf32>
    %11 = vector.shape_cast %8 : vector<16x32xf32> to vector<1x16x32xf32>
    tpu.vector_store %arg6[%c0_8, %c0_9, %c0_10], %11 {strides = array<i32>} : memref<1x16x32xf32, #tpu.memory_space<vmem>>, vector<1x16x32xf32>,
    return
  }
  func.func @transform_0(%arg0: i32, %arg1: i32) -> (i32, i32, i32) {
    %c0_i32 = arith.constant 0 : i32
    %c0_i32_0 = arith.constant 0 : i32
    return %arg0, %arg1, %c0_i32 : i32, i32, i32
  }
  func.func @transform_1(%arg0: i32, %arg1: i32) -> (i32, i32) {
    %c0_i32 = arith.constant 0 : i32
    %c0_i32_0 = arith.constant 0 : i32
    %c0_i32_1 = arith.constant 0 : i32
    return %c0_i32, %c0_i32_0 : i32, i32
  }
  func.func @transform_2(%arg0: i32, %arg1: i32) -> (i32, i32) {
    %c0_i32 = arith.constant 0 : i32
    %c0_i32_0 = arith.constant 0 : i32
    %c0_i32_1 = arith.constant 0 : i32
    return %c0_i32, %c0_i32_0 : i32, i32
  }
  func.func @transform_3(%arg0: i32, %arg1: i32) -> (i32, i32) {
    %c0_i32 = arith.constant 0 : i32
    %c0_i32_0 = arith.constant 0 : i32
    return %arg1, %c0_i32 : i32, i32
  }
  func.func @transform_4(%arg0: i32, %arg1: i32) -> (i32, i32, i32) {
    %c0_i32 = arith.constant 0 : i32
    %c0_i32_0 = arith.constant 0 : i32
    return %arg0, %arg1, %c0_i32 : i32, i32, i32
  }
}

</mosaic_0001>

<llo_original>
// kernel: siglip_vision_embeddings.1
$region0: #{siglip_vision_embeddings.1}
  #allocation0 [shape = 'u32[]', space=smem, size = 0x4, offset = 0x4, fixed_abs, tag = 'smem constant byte address 0x4 - core index']
  #allocation1 [shape = 'u32[72,128]{1,0:T(1,128)}', space=vmem, size = 0x9000, scoped, tag = 'internal scratch']
  %s0 = inlined_call_operand.vmem [shape: f32[2,16,48], index: 0, kind: input, shape index: {}]
  %s1 = inlined_call_operand.vmem [shape: f32[48,32], index: 1, kind: input, shape index: {}]
  %s2 = inlined_call_operand.vmem [shape: f32[1,32], index: 2, kind: input, shape index: {}]
  %s3 = inlined_call_operand.vmem [shape: f32[16,32], index: 3, kind: input, shape index: {}]
  %s4 = inlined_call_operand.hbm [shape: f32[2,16,32], index: 4, kind: output, shape index: {}]
  %s5 = sld [smem:[#allocation0]]
  $region49: #{siglip_vision_embeddings.1} parent=0
    _
  %s7 = ssub.s32 1, %s5
  %s8 = scalar_select 0, %s7, %s5
  $region1: #{siglip_vision_embeddings.1} parent=0
    #allocation2 [shape = 'u8[16384]{0}', space=vmem, size = 0x4000, scoped, tag = 'output window, operand 0']
    #allocation3 [shape = 's32[2]{0}', space=sflag, size = 0x8, scoped, tag = 'scoped memory for siglip_vision_embeddings.1']
    %9 = vsyncpa [#allocation3], 0
    %s10 = scalar_lea.sflag [#allocation3], 1
    %11 = vsyncpa %s10, 0
    loop: start=0, step=1, limit=4
    $region2: #{siglip_vision_embeddings.1} parent=1 // loop_pre_header
      _
    $region3: #{siglip_vision_embeddings.1} parent=1 // loop_header
      %s13 = sphi 0, %s17
      %p14 = scmp.ge.s32.totalorder %s13, 4
      %s20 = sphi 0, %s32
      %s21 = sphi 0, %s28
      %s22 = sphi 0, %s20
      %s23 = sphi 0, %s21
      %s24 = sphi 0, %s22
      %s25 = sphi 0, %s23
      %s37 = sphi 0, %s39
      %s40 = sphi 0, %s37
      %s41 = sphi 0, %s40
      %s57 = sphi 0, %s41
      %s61 = sphi 0, %s61
      %s63 = sphi 0, %s61
      %s64 = sphi 0, %s63
      %s78 = sphi 0, %s64
      %s82 = sphi 0, %s82
      %s84 = sphi 0, %s82
      %s85 = sphi 0, %s84
      %s99 = sphi 0, %s85
      %s105 = sphi 0, %s107
      %s108 = sphi 0, %s105
      %s109 = sphi 0, %s108
      %s125 = sphi 0, %s109
      %s133 = sphi 0, %s135
      %s136 = sphi 0, %s133
      %s137 = sphi 0, %s136
      %s153 = sphi 0, %s137
    $region4: #{siglip_vision_embeddings.1} parent=1 // loop_header_branch
      %16 = sbr.rel (%p14) target = $region8
    $region5: #{siglip_vision_embeddings.1} parent=1 // loop_body
      %s18 = ssub.s32 %s13, 1
      %s19 = ssub.s32 %s13, 2
      %s26 = sadd.s32 1, %s21
      %p27 = scmp.ge.s32.totalorder %s26, 1
      %s28 = scalar_select %p27, 0, %s26
      %s29 = sadd.s32 1, %s20
      %s30 = scalar_select %p27, %s29, %s20
      %p31 = scmp.ge.s32.totalorder %s30, 2
      %s32 = scalar_select %p31, 0, %s30
      %s33 = ssub.s32 %s20, %s32
      %s34 = ssub.s32 %s21, %s28
      %s35 = sor.u32 %s33, %s34
      %p36 = scmp.eq.s32.totalorder %s35, 0
      %s38 = sadd.s32 %s37, 1
      %s39 = scalar_select %p36, %s37, %s38
      %p42 = pneg %p36
      %p43 = scmp.eq.s32.totalorder %s13, 1
      %p44 = por %p42, %p43
      %p45 = scmp.ne.s32.totalorder %s37, %s40
      %p46 = scmp.eq.s32.totalorder %s13, 0
      %p47 = por %p45, %p46
      %p48 = scmp.ne.s32.totalorder %s37, %s40
      %p49 = scmp.eq.s32.totalorder %s18, 1
      %p50 = por %p48, %p49
      %p51 = scmp.ne.s32.totalorder %s40, %s41
      %p52 = scmp.eq.s32.totalorder %s18, 0
      %p53 = por %p51, %p52
      %p54 = scmp.ne.s32.totalorder %s40, %s41
      %p55 = scmp.eq.s32.totalorder %s19, 1
      %p56 = por %p54, %p55
      %p58 = scmp.ne.s32.totalorder %s41, %s57
      %p59 = scmp.eq.s32.totalorder %s19, 0
      %p60 = por %p58, %p59
      %s62 = sadd.s32 %s61, 1
      %p65 = scmp.eq.s32.totalorder %s13, 1
      %p66 = scmp.ne.s32.totalorder %s61, %s63
      %p67 = scmp.eq.s32.totalorder %s13, 0
      %p68 = por %p66, %p67
      %p69 = scmp.ne.s32.totalorder %s61, %s63
      %p70 = scmp.eq.s32.totalorder %s18, 1
      %p71 = por %p69, %p70
      %p72 = scmp.ne.s32.totalorder %s63, %s64
      %p73 = scmp.eq.s32.totalorder %s18, 0
      %p74 = por %p72, %p73
      %p75 = scmp.ne.s32.totalorder %s63, %s64
      %p76 = scmp.eq.s32.totalorder %s19, 1
      %p77 = por %p75, %p76
      %p79 = scmp.ne.s32.totalorder %s64, %s78
      %p80 = scmp.eq.s32.totalorder %s19, 0
      %p81 = por %p79, %p80
      %s83 = sadd.s32 %s82, 1
      %p86 = scmp.eq.s32.totalorder %s13, 1
      %p87 = scmp.ne.s32.totalorder %s82, %s84
      %p88 = scmp.eq.s32.totalorder %s13, 0
      %p89 = por %p87, %p88
      %p90 = scmp.ne.s32.totalorder %s82, %s84
      %p91 = scmp.eq.s32.totalorder %s18, 1
      %p92 = por %p90, %p91
      %p93 = scmp.ne.s32.totalorder %s84, %s85
      %p94 = scmp.eq.s32.totalorder %s18, 0
      %p95 = por %p93, %p94
      %p96 = scmp.ne.s32.totalorder %s84, %s85
      %p97 = scmp.eq.s32.totalorder %s19, 1
      %p98 = por %p96, %p97
      %p100 = scmp.ne.s32.totalorder %s85, %s99
      %p101 = scmp.eq.s32.totalorder %s19, 0
      %p102 = por %p100, %p101
      %s103 = ssub.s32 %s21, %s28
      %p104 = scmp.eq.s32.totalorder %s103, 0
      %s106 = sadd.s32 %s105, 1
      %s107 = scalar_select %p104, %s105, %s106
      %p110 = pneg %p104
      %p111 = scmp.eq.s32.totalorder %s13, 1
      %p112 = por %p110, %p111
      %p113 = scmp.ne.s32.totalorder %s105, %s108
      %p114 = scmp.eq.s32.totalorder %s13, 0
      %p115 = por %p113, %p114
      %p116 = scmp.ne.s32.totalorder %s105, %s108
      %p117 = scmp.eq.s32.totalorder %s18, 1
      %p118 = por %p116, %p117
      %p119 = scmp.ne.s32.totalorder %s108, %s109
      %p120 = scmp.eq.s32.totalorder %s18, 0
      %p121 = por %p119, %p120
      %p122 = scmp.ne.s32.totalorder %s108, %s109
      %p123 = scmp.eq.s32.totalorder %s19, 1
      %p124 = por %p122, %p123
      %p126 = scmp.ne.s32.totalorder %s109, %s125
      %p127 = scmp.eq.s32.totalorder %s19, 0
      %p128 = por %p126, %p127
      %s129 = ssub.s32 %s20, %s32
      %s130 = ssub.s32 %s21, %s28
      %s131 = sor.u32 %s129, %s130
      %p132 = scmp.eq.s32.totalorder %s131, 0
      %s134 = sadd.s32 %s133, 1
      %s135 = scalar_select %p132, %s133, %s134
      %p138 = pneg %p132
      %p139 = scmp.eq.s32.totalorder %s13, 1
      %p140 = por %p138, %p139
      %p141 = scmp.ne.s32.totalorder %s133, %s136
      %p142 = scmp.eq.s32.totalorder %s13, 0
      %p143 = por %p141, %p142
      %p144 = scmp.ne.s32.totalorder %s133, %s136
      %p145 = scmp.eq.s32.totalorder %s18, 1
      %p146 = por %p144, %p145
      %p147 = scmp.ne.s32.totalorder %s136, %s137
      %p148 = scmp.eq.s32.totalorder %s18, 0
      %p149 = por %p147, %p148
      %p150 = scmp.ne.s32.totalorder %s136, %s137
      %p151 = scmp.eq.s32.totalorder %s19, 1
      %p152 = por %p150, %p151
      %p154 = scmp.ne.s32.totalorder %s137, %s153
      %p155 = scmp.eq.s32.totalorder %s19, 0
      %p156 = por %p154, %p155
      %p157 = scmp.le.s32.totalorder 1, %s13
      %p158 = scmp.lt.s32.totalorder %s13, 3
      %p159 = pnand %p157, %p158
      %p160 = pneg %p159
      // Predicated region
      $region9: #{siglip_vision_embeddings.1} parent=5 // pred_check
        _
      $region10: #{siglip_vision_embeddings.1} parent=5 // pred_check_branch
        %162 = sbr.rel (%p159) target = $region12
      $region11: #{siglip_vision_embeddings.1} parent=5 // pred_region
        %s163 = ssub.s32 %s13, 1
        // Predicated region
        $region13: #{siglip_vision_embeddings.1} parent=11 // pred_check
          %p164 = pneg %p74
        $region14: #{siglip_vision_embeddings.1} parent=11 // pred_check_branch
          %166 = sbr.rel (%p164) target = $region16
        $region15: #{siglip_vision_embeddings.1} parent=11 // pred_region
          _
        $region16: #{siglip_vision_embeddings.1} parent=11 // pred_fallthru
          _
        // Predicated region
        $region17: #{siglip_vision_embeddings.1} parent=11 // pred_check
          %p167 = pneg %p95
        $region18: #{siglip_vision_embeddings.1} parent=11 // pred_check_branch
          %169 = sbr.rel (%p167) target = $region20
        $region19: #{siglip_vision_embeddings.1} parent=11 // pred_region
          _
        $region20: #{siglip_vision_embeddings.1} parent=11 // pred_fallthru
          _
        // Predicated region
        $region21: #{siglip_vision_embeddings.1} parent=11 // pred_check
          %p170 = pneg %p121
        $region22: #{siglip_vision_embeddings.1} parent=11 // pred_check_branch
          %172 = sbr.rel (%p170) target = $region24
        $region23: #{siglip_vision_embeddings.1} parent=11 // pred_region
          %s173 = smul.u32 2, %s23
          %p174 = scmp.lt.s32.totalorder %s173, 1
          %s175 = scalar_select %p174, %s173, 1
          %s176 = smul.addr %s175, 8
          %s177 = scalar_lea.vmem %s3, %s176
          %s178 = smul.u32 2, %s23
        $region24: #{siglip_vision_embeddings.1} parent=11 // pred_fallthru
          _
      $region12: #{siglip_vision_embeddings.1} parent=5 // pred_fallthru
        _
      %p179 = scmp.lt.s32.totalorder %s13, 2
      // Predicated region
      $region25: #{siglip_vision_embeddings.1} parent=5 // pred_check
        %p180 = pneg %p179
      $region26: #{siglip_vision_embeddings.1} parent=5 // pred_check_branch
        %182 = sbr.rel (%p180) target = $region28
      $region27: #{siglip_vision_embeddings.1} parent=5 // pred_region
        // Predicated region
        $region29: #{siglip_vision_embeddings.1} parent=27 // pred_check
          %p183 = pneg %p47
        $region30: #{siglip_vision_embeddings.1} parent=27 // pred_check_branch
          %185 = sbr.rel (%p183) target = $region32
        $region31: #{siglip_vision_embeddings.1} parent=27 // pred_region
          %s186 = smul.u32 2, %s21
          %p187 = scmp.lt.s32.totalorder %s20, 1
          %s188 = scalar_select %p187, %s20, 1
          %p189 = scmp.lt.s32.totalorder %s186, 1
          %s190 = scalar_select %p189, %s186, 1
          %s191 = smul.addr %s188, 2
          %s192 = sadd.s32 %s190, %s191
          %s193 = smul.addr %s192, 8
          %s194 = scalar_lea.vmem %s0, %s193
          %s195 = smul.u32 2, %s21
        $region32: #{siglip_vision_embeddings.1} parent=27 // pred_fallthru
          _
      $region28: #{siglip_vision_embeddings.1} parent=5 // pred_fallthru
        _
      %p196 = scmp.le.s32.totalorder 1, %s13
      %p197 = scmp.lt.s32.totalorder %s13, 3
      %p198 = pnand %p196, %p197
      %p199 = pneg %p198
      // Predicated region
      $region33: #{siglip_vision_embeddings.1} parent=5 // pred_check
        _
      $region34: #{siglip_vision_embeddings.1} parent=5 // pred_check_branch
        %201 = sbr.rel (%p198) target = $region36
      $region35: #{siglip_vision_embeddings.1} parent=5 // pred_region
        %s202 = ssub.s32 %s13, 1
        %s203 = smul.u32 2, %s23
        %p204 = scmp.lt.s32.totalorder %s22, 1
        %s205 = scalar_select %p204, %s22, 1
        %p206 = scmp.lt.s32.totalorder %s203, 1
        %s207 = scalar_select %p206, %s203, 1
        %s208 = smul.addr %s205, 2
        %s209 = sadd.s32 %s207, %s208
        %s210 = smul.addr %s209, 8
        %s211 = scalar_lea.vmem %s0, %s210
        %p212 = pneg %p53
        %p213 = pneg %p50
        %p214 = pneg %p74
        %p215 = pneg %p71
        %p216 = pneg %p95
        %p217 = pneg %p92
        %s218 = smul.u32 2, %s23
        %p219 = scmp.lt.s32.totalorder %s218, 1
        %s220 = scalar_select %p219, %s218, 1
        %s221 = smul.addr %s220, 8
        %s222 = scalar_lea.vmem %s3, %s221
        %p223 = pneg %p121
        %p224 = pneg %p118
        %p225 = pneg %p149
        %p226 = pneg %p146
        %s227 = sand.u32 %s136, 1
        %s228 = scalar_lea.sflag [#allocation3], %s227
        %s229 = sand.u32 %s136, 1
        %s230 = smul.addr %s229, 16
        %s231 = scalar_lea.vmem [#allocation2], %s230
        %s232 = smul.u32 2, %s23
        %p233 = scmp.lt.s32.totalorder %s22, 1
        %s234 = scalar_select %p233, %s22, 1
        %p235 = scmp.lt.s32.totalorder %s232, 1
        %s236 = scalar_select %p235, %s232, 1
        %s237 = smul.addr %s234, 2
        %s238 = sadd.s32 %s236, %s237
        %s239 = smul.addr %s238, 8
        %s240 = scalar_lea.vmem %s0, %s239
        %s241 = smul.u32 2, %s23
        %s242 = smul.u32 2, %s23
        %p243 = scmp.lt.s32.totalorder %s242, 1
        %s244 = scalar_select %p243, %s242, 1
        %s245 = smul.addr %s244, 8
        %s246 = scalar_lea.vmem %s3, %s245
        %s247 = smul.u32 2, %s23
        %s248 = smul.u32 2, %s23
        %v249 = vld [vmem:[%s240] sm:$0xff]
        %v250 = vld [vmem:[%s240 + $0x8] sm:$0xff]
        %v251 = vld [vmem:[%s1] sm:$0xff]
        %v252 = vld [vmem:[%s1 + $0x8] sm:$0xff]
        %v253 = vld [vmem:[%s1 + $0x10] sm:$0xff]
        %v254 = vld [vmem:[%s1 + $0x18] sm:$0xff]
        %v255 = vld [vmem:[%s1 + $0x20] sm:$0xff]
        %v256 = vld [vmem:[%s1 + $0x28] sm:$0xff]
        %v257 = vld [vmem:[%s2] sm:$0x1]
        %v259 = vperm.slane %v257, 0
        %vm261 = vcmask 392192
        %v263 = vsel %vm261, %v249, 0
        %v266 = vsel %vm261, %v250, 0
        %268 = vmatpush.msra.mxu0 0.0
        %269 = vmatpush.msra.mxu0 0.0
        %270 = vmatpush.msra.mxu0 0.0
        %271 = vmatpush.msra.mxu0 0.0
        %272 = vmatpush.msra.mxu0 0.0
        %273 = vmatpush.msra.mxu0 0.0
        %274 = vmatpush.msra.mxu0 0.0
        %275 = vmatpush.msra.mxu0 0.0
        %276 = vmatpush.msra.mxu0 0.0
        %277 = vmatpush.msra.mxu0 0.0
        %278 = vmatpush.msra.mxu0 %v256
        %279 = vmatpush.msra.mxu0 %v255
        %280 = vmatpush.msra.mxu0 %v254
        %281 = vmatpush.msra.mxu0 %v253
        %282 = vmatpush.msra.mxu0 %v252
        %283 = vmatpush.msra.mxu0 %v251
        %284 = vmatmul.f32.gmra.mxu0 %v263
        %v285 = vpop.f32.mrf.mxu0
        %v286 = vadd.f32 %v259, %v285
        %287 = vmatmul.f32.gmra.mxu0 %v266
        %v288 = vpop.f32.mrf.mxu0
        %v289 = vadd.f32 %v259, %v288
        %290 = vdwg.mxu0
        %v291 = vld [vmem:[%s246] sm:$0xff]
        %v292 = vld [vmem:[%s246 + $0x8] sm:$0xff]
        %v293 = vadd.f32 %v286, %v291
        %v294 = vadd.f32 %v289, %v292
        %vm295 = vcmask 261120
        %296 = vst.msk [vmem:[%s231] sm:$0xff] %vm295, %v293
        %297 = vst.msk [vmem:[%s231 + $0x8] sm:$0xff] %vm295, %v294
        %s298 = sand.u32 %s136, 1
        %s299 = scalar_lea.sflag [#allocation3], %s298
        %s300 = sand.u32 %s136, 1
        %s301 = smul.addr %s300, 16
        %s302 = scalar_lea.vmem [#allocation2], %s301
        // Predicated region
        $region37: #{siglip_vision_embeddings.1} parent=35 // pred_check
          %p303 = pneg %p146
        $region38: #{siglip_vision_embeddings.1} parent=35 // pred_check_branch
          %305 = sbr.rel (%p303) target = $region40
        $region39: #{siglip_vision_embeddings.1} parent=35 // pred_region
          %s306 = smul.u32 2, %s23
          %308 = vsyncadd %s299, 0
          %s309 = smul.addr %s22, 2
          %s310 = sadd.s32 %s306, %s309
          %s311 = smul.addr %s310, 8
          %s312 = scalar_lea.hbm %s4, %s311
          %s313 = sshll.u32 %s302, 4
          %s314 = int_to_ptr.vmem [resolvable:$true] %s313
          %s315 = sshll.u32 %s312, 4
          %s316 = int_to_ptr.hbm [resolvable:$true] %s315
          %321 = dma.vmem_to_hbm [thread:$0]  %s314, 256, %s316, %s299, 128, 128, 8
        $region40: #{siglip_vision_embeddings.1} parent=35 // pred_fallthru
          _
      $region36: #{siglip_vision_embeddings.1} parent=5 // pred_fallthru
        _
      %p322 = scmp.le.s32.totalorder 2, %s13
      // Predicated region
      $region41: #{siglip_vision_embeddings.1} parent=5 // pred_check
        %p323 = pneg %p322
      $region42: #{siglip_vision_embeddings.1} parent=5 // pred_check_branch
        %325 = sbr.rel (%p323) target = $region44
      $region43: #{siglip_vision_embeddings.1} parent=5 // pred_region
        %s326 = ssub.s32 %s13, 2
        // Predicated region
        $region45: #{siglip_vision_embeddings.1} parent=43 // pred_check
          %p327 = pneg %p152
        $region46: #{siglip_vision_embeddings.1} parent=43 // pred_check_branch
          %329 = sbr.rel (%p327) target = $region48
        $region47: #{siglip_vision_embeddings.1} parent=43 // pred_region
          %s330 = sand.u32 %s137, 1
          %s331 = scalar_lea.sflag [#allocation3], %s330
          %s332 = sand.u32 %s137, 1
          %s333 = smul.addr %s332, 16
          %s334 = scalar_lea.vmem [#allocation2], %s333
          %336 = dma.done %s331, 256
        $region48: #{siglip_vision_embeddings.1} parent=43 // pred_fallthru
          _
      $region44: #{siglip_vision_embeddings.1} parent=5 // pred_fallthru
        _
    $region6: #{siglip_vision_embeddings.1} parent=1 // loop_footer
      %s17 = sadd.s32 1, %s13
    $region7: #{siglip_vision_embeddings.1} parent=1 // loop_footer_branch
      %12 = sbr.rel target = $region3
    $region8: #{siglip_vision_embeddings.1} parent=1 // loop_exit
      _
    %337 = vsyncpa [#allocation3], 1
    %s338 = scalar_lea.sflag [#allocation3], 1
    %339 = vsyncpa %s338, 1

</llo_original>
